<compile_context>
chip_gen: v7x
topology: tpu7x:2x2x1
jax: 0.10.0
libtpu: 0.0.40
codegen_flags: <defaults>
</compile_context>

<pallas_src>
import functools

import jax
import jax.numpy as jnp
from jax.experimental import pallas as pl
from jax.experimental.pallas import tpu as pltpu


def _conv1x1_kernel(w_ref, b_ref, x_ref, o_ref, *, cin, cout):
    # w_ref: (Cout, Cin) in SMEM, b_ref: (Cout,) in SMEM
    # x_ref: (1, Cin, T) in VMEM, o_ref: (1, Cout, T) in VMEM
    # Hoist channel loads once (reused for every output channel).
    xs = [x_ref[0, ci:ci + 1, :] for ci in range(cin)]          # each (1, T)
    for co in range(cout):
        acc = xs[0] * w_ref[co, 0]
        for ci in range(1, cin):
            acc = acc + xs[ci] * w_ref[co, ci]
        o_ref[0, co:co + 1, :] = acc + b_ref[co]


def conv1x1_pallas(x_nchw, weight, bias):
    """1x1 Conv2d: x_nchw (N, Cin, H, W), weight (Cout, Cin, 1, 1), bias (Cout,)."""
    N, Cin, H, W = x_nchw.shape
    Cout = weight.shape[0]
    HW = H * W

    # Free reshape (merges trailing dims only; no data movement).
    x_flat = x_nchw.reshape(N, Cin, HW)
    w_mat = weight.reshape(Cout, Cin)
    b_vec = bias.reshape(Cout)

    # Lane-dense tile along H*W: multiple of 128, capped at 2048 (tiny VMEM
    # footprint; safe for v7x's 64 MiB VMEM as well).
    LANE = 128
    MAX_TILE_HW = 2048
    hw_padded = ((HW + LANE - 1) // LANE) * LANE
    tile_hw = min(hw_padded, MAX_TILE_HW)
    grid = (N, pl.cdiv(HW, tile_hw))

    kernel = functools.partial(_conv1x1_kernel, cin=Cin, cout=Cout)

    cost = pl.CostEstimate(
        flops=2 * N * Cout * Cin * HW,
        transcendentals=0,
        bytes_accessed=4 * (N * Cin * HW + N * Cout * HW + Cout * Cin + Cout),
    )

    out_flat = pl.pallas_call(
        kernel,
        out_shape=jax.ShapeDtypeStruct((N, Cout, HW), x_flat.dtype),
        grid=grid,
        in_specs=[
            pl.BlockSpec(memory_space=pltpu.MemorySpace.SMEM),   # weight (Cout, Cin)
            pl.BlockSpec(memory_space=pltpu.MemorySpace.SMEM),   # bias (Cout,)
            pl.BlockSpec((1, Cin, tile_hw), lambda n, j: (n, 0, j)),
        ],
        out_specs=pl.BlockSpec((1, Cout, tile_hw), lambda n, j: (n, 0, j)),
        compiler_params=pltpu.CompilerParams(
            dimension_semantics=("parallel", "parallel"),
        ),
        cost_estimate=cost,
    )(w_mat, b_vec, x_flat)

    # Free reshape back to NCHW (splits last dim only).
    return out_flat.reshape(N, Cout, H, W)


if __name__ == "__main__":
    in_channels = 2
    out_channels = 2
    kernel_size = 1

    key = jax.random.PRNGKey(0)
    kx, kw, kb = jax.random.split(key, 3)

    # Small deterministic example input (NCHW), consistent with the module.
    N, H, W = 2, 16, 16
    x = jax.random.normal(kx, (N, in_channels, H, W), dtype=jnp.float32)

    # Deterministic parameter init (synthetic; not a checkpoint load).
    fan_in = in_channels * kernel_size * kernel_size
    bound = 1.0 / jnp.sqrt(fan_in)
    weight = jax.random.uniform(
        kw, (out_channels, in_channels, kernel_size, kernel_size),
        minval=-bound, maxval=bound, dtype=jnp.float32)
    bias = jax.random.uniform(
        kb, (out_channels,), minval=-bound, maxval=bound, dtype=jnp.float32)

    out = conv1x1_pallas(x, weight, bias)
    out = jax.block_until_ready(out)

    # Reference check against lax conv (plain JAX) for sanity.
    ref = jax.lax.conv_general_dilated(
        x, weight, window_strides=(1, 1), padding="VALID",
        dimension_numbers=("NCHW", "OIHW", "NCHW")) + bias.reshape(1, -1, 1, 1)
    assert out.shape == (N, out_channels, H, W)
    assert jnp.allclose(out, ref, atol=1e-5, rtol=1e-5)

    print("KERNEL_OK")
</pallas_src>

<mosaic_0001>
module attributes {stable_mosaic.version = 11 : i64} {
  func.func @_conv1x1_kernel(%arg0: i32, %arg1: i32, %arg2: memref<2x2xf32, #tpu.memory_space<smem>>, %arg3: memref<2xf32, #tpu.memory_space<smem>>, %arg4: memref<1x2x256xf32, #tpu.memory_space<vmem>>, %arg5: memref<1x2x256xf32, #tpu.memory_space<vmem>>) attributes {dimension_semantics = [#tpu.dimension_semantics<parallel>, #tpu.dimension_semantics<parallel>], iteration_bounds = array<i64: 2, 1>, scalar_prefetch = 0 : i64, scratch_operands = 0 : i64, tpu.core_type = #tpu.core_type<tc>, window_params = [{transform_indices = @transform_0, window_bounds = array<i64: 2, 2>}, {transform_indices = @transform_1, window_bounds = array<i64: 2>}, {transform_indices = @transform_2, window_bounds = array<i64: 1, 2, 256>}, {transform_indices = @transform_3, window_bounds = array<i64: 1, 2, 256>}]} {
    %c0 = arith.constant 0 : index
    %c0_0 = arith.constant 0 : index
    %c0_1 = arith.constant 0 : index
    %0 = vector.load %arg4[%c0, %c0_0, %c0_1] : memref<1x2x256xf32, #tpu.memory_space<vmem>>, vector<1x1x256xf32>
    %1 = vector.shape_cast %0 : vector<1x1x256xf32> to vector<1x256xf32>
    %c0_2 = arith.constant 0 : index
    %c1 = arith.constant 1 : index
    %c0_3 = arith.constant 0 : index
    %2 = vector.load %arg4[%c0_2, %c1, %c0_3] : memref<1x2x256xf32, #tpu.memory_space<vmem>>, vector<1x1x256xf32>
    %3 = vector.shape_cast %2 : vector<1x1x256xf32> to vector<1x256xf32>
    %c0_4 = arith.constant 0 : index
    %c0_5 = arith.constant 0 : index
    %4 = memref.load %arg2[%c0_4, %c0_5] : memref<2x2xf32, #tpu.memory_space<smem>>
    %5 = vector.broadcast %4 : f32 to vector<1x256xf32>
    %6 = arith.mulf %1, %5 : vector<1x256xf32>
    %c0_6 = arith.constant 0 : index
    %c1_7 = arith.constant 1 : index
    %7 = memref.load %arg2[%c0_6, %c1_7] : memref<2x2xf32, #tpu.memory_space<smem>>
    %8 = vector.broadcast %7 : f32 to vector<1x256xf32>
    %9 = arith.mulf %3, %8 : vector<1x256xf32>
    %10 = arith.addf %6, %9 : vector<1x256xf32>
    %c0_8 = arith.constant 0 : index
    %11 = memref.load %arg3[%c0_8] : memref<2xf32, #tpu.memory_space<smem>>
    %12 = vector.broadcast %11 : f32 to vector<1x256xf32>
    %13 = arith.addf %10, %12 : vector<1x256xf32>
    %c0_9 = arith.constant 0 : index
    %c0_10 = arith.constant 0 : index
    %c0_11 = arith.constant 0 : index
    %14 = vector.load %arg5[%c0_9, %c0_10, %c0_11] : memref<1x2x256xf32, #tpu.memory_space<vmem>>, vector<1x1x256xf32>
    %15 = vector.shape_cast %14 : vector<1x1x256xf32> to vector<1x256xf32>
    %16 = vector.shape_cast %13 : vector<1x256xf32> to vector<1x1x256xf32>
    tpu.vector_store %arg5[%c0_9, %c0_10, %c0_11], %16 {strides = array<i32>} : memref<1x2x256xf32, #tpu.memory_space<vmem>>, vector<1x1x256xf32>,
    %c1_12 = arith.constant 1 : index
    %c0_13 = arith.constant 0 : index
    %17 = memref.load %arg2[%c1_12, %c0_13] : memref<2x2xf32, #tpu.memory_space<smem>>
    %18 = vector.broadcast %17 : f32 to vector<1x256xf32>
    %19 = arith.mulf %1, %18 : vector<1x256xf32>
    %c1_14 = arith.constant 1 : index
    %c1_15 = arith.constant 1 : index
    %20 = memref.load %arg2[%c1_14, %c1_15] : memref<2x2xf32, #tpu.memory_space<smem>>
    %21 = vector.broadcast %20 : f32 to vector<1x256xf32>
    %22 = arith.mulf %3, %21 : vector<1x256xf32>
    %23 = arith.addf %19, %22 : vector<1x256xf32>
    %c1_16 = arith.constant 1 : index
    %24 = memref.load %arg3[%c1_16] : memref<2xf32, #tpu.memory_space<smem>>
    %25 = vector.broadcast %24 : f32 to vector<1x256xf32>
    %26 = arith.addf %23, %25 : vector<1x256xf32>
    %c0_17 = arith.constant 0 : index
    %c1_18 = arith.constant 1 : index
    %c0_19 = arith.constant 0 : index
    %27 = vector.load %arg5[%c0_17, %c1_18, %c0_19] : memref<1x2x256xf32, #tpu.memory_space<vmem>>, vector<1x1x256xf32>
    %28 = vector.shape_cast %27 : vector<1x1x256xf32> to vector<1x256xf32>
    %29 = vector.shape_cast %26 : vector<1x256xf32> to vector<1x1x256xf32>
    tpu.vector_store %arg5[%c0_17, %c1_18, %c0_19], %29 {strides = array<i32>} : memref<1x2x256xf32, #tpu.memory_space<vmem>>, vector<1x1x256xf32>,
    return
  }
  func.func @transform_0(%arg0: i32, %arg1: i32) -> (i32, i32) {
    %c0_i32 = arith.constant 0 : i32
    %c0_i32_0 = arith.constant 0 : i32
    %c0_i32_1 = arith.constant 0 : i32
    return %c0_i32, %c0_i32_0 : i32, i32
  }
  func.func @transform_1(%arg0: i32, %arg1: i32) -> i32 {
    %c0_i32 = arith.constant 0 : i32
    %c0_i32_0 = arith.constant 0 : i32
    return %c0_i32 : i32
  }
  func.func @transform_2(%arg0: i32, %arg1: i32) -> (i32, i32, i32) {
    %c0_i32 = arith.constant 0 : i32
    %c0_i32_0 = arith.constant 0 : i32
    return %arg0, %c0_i32, %arg1 : i32, i32, i32
  }
  func.func @transform_3(%arg0: i32, %arg1: i32) -> (i32, i32, i32) {
    %c0_i32 = arith.constant 0 : i32
    %c0_i32_0 = arith.constant 0 : i32
    return %arg0, %c0_i32, %arg1 : i32, i32, i32
  }
}

</mosaic_0001>

<llo_original>
// kernel: tpu_custom_call.1
$region0: #{tpu_custom_call.1}
  #allocation0 [shape = 'u32[]', space=smem, size = 0x4, offset = 0x4, fixed_abs, tag = 'smem constant byte address 0x4 - core index']
  #allocation1 [shape = 'u32[144,128]{1,0:T(1,128)}', space=vmem, size = 0x12000, scoped, tag = 'internal scratch']
  %s0 = inlined_call_operand.hbm [shape: f32[2,2], index: 0, kind: input, shape index: {}]
  %s1 = inlined_call_operand.vmem [shape: f32[2], index: 1, kind: input, shape index: {}]
  %s2 = inlined_call_operand.hbm [shape: f32[2,2,256], index: 2, kind: input, shape index: {}]
  %s3 = inlined_call_operand.hbm [shape: f32[2,2,256], index: 3, kind: output, shape index: {}]
  %s4 = sld [smem:[#allocation0]]
  $region57: #{tpu_custom_call.1} parent=0
    _
  %s6 = ssub.s32 1, %s4
  %s7 = scalar_select 0, %s6, %s4
  $region1: #{tpu_custom_call.1} parent=0
    #allocation2 [shape = 'u8[1024]{0}', space=smem, size = 0x400, scoped, tag = 'input window, operand 0, single buffered']
    #allocation3 [shape = 's32[2]{0}', space=sflag, size = 0x8, scoped, tag = 'scoped memory for tpu_custom_call.1']
    #allocation4 [shape = 's32[2]{0}', space=sflag, size = 0x8, scoped, tag = 'scoped memory for tpu_custom_call.1']
    #allocation5 [shape = 's32[2]{0}', space=sflag, size = 0x8, scoped, tag = 'scoped memory for tpu_custom_call.1']
    #allocation6 [shape = 's32[2]{0}', space=sflag, size = 0x8, scoped, tag = 'scoped memory for tpu_custom_call.1']
    #allocation7 [shape = 'u8[512]{0}', space=smem, size = 0x200, scoped, tag = 'input window, operand 1, single buffered']
    #allocation8 [shape = 'u8[4096]{0}', space=vmem, size = 0x1000, scoped, tag = 'input window, operand 2']
    #allocation9 [shape = 'u8[4096]{0}', space=vmem, size = 0x1000, scoped, tag = 'output window, operand 0']
    %8 = vsyncpa [#allocation5], 0
    %9 = vsyncpa [#allocation6], 0
    %10 = vsyncpa [#allocation3], 0
    %s11 = scalar_lea.sflag [#allocation3], 1
    %12 = vsyncpa %s11, 0
    %13 = vsyncpa [#allocation4], 0
    %s14 = scalar_lea.sflag [#allocation4], 1
    %15 = vsyncpa %s14, 0
    loop: start=0, step=1, limit=4
    $region2: #{tpu_custom_call.1} parent=1 // loop_pre_header
      _
    $region3: #{tpu_custom_call.1} parent=1 // loop_header
      %s17 = sphi 0, %s21
      %p18 = scmp.ge.s32.totalorder %s17, 4
      %s24 = sphi 0, %s36
      %s25 = sphi 0, %s32
      %s26 = sphi 0, %s24
      %s27 = sphi 0, %s25
      %s28 = sphi 0, %s26
      %s29 = sphi 0, %s27
      %s37 = sphi 0, %s37
      %s39 = sphi 0, %s37
      %s40 = sphi 0, %s39
      %s54 = sphi 0, %s40
      %s58 = sphi 0, %s58
      %s60 = sphi 0, %s58
      %s61 = sphi 0, %s60
      %s75 = sphi 0, %s61
      %s83 = sphi 0, %s85
      %s86 = sphi 0, %s83
      %s87 = sphi 0, %s86
      %s103 = sphi 0, %s87
      %s111 = sphi 0, %s113
      %s114 = sphi 0, %s111
      %s115 = sphi 0, %s114
      %s131 = sphi 0, %s115
    $region4: #{tpu_custom_call.1} parent=1 // loop_header_branch
      %20 = sbr.rel (%p18) target = $region8
    $region5: #{tpu_custom_call.1} parent=1 // loop_body
      %s22 = ssub.s32 %s17, 1
      %s23 = ssub.s32 %s17, 2
      %s30 = sadd.s32 1, %s25
      %p31 = scmp.ge.s32.totalorder %s30, 1
      %s32 = scalar_select %p31, 0, %s30
      %s33 = sadd.s32 1, %s24
      %s34 = scalar_select %p31, %s33, %s24
      %p35 = scmp.ge.s32.totalorder %s34, 2
      %s36 = scalar_select %p35, 0, %s34
      %s38 = sadd.s32 %s37, 1
      %p41 = scmp.eq.s32.totalorder %s17, 1
      %p42 = scmp.ne.s32.totalorder %s37, %s39
      %p43 = scmp.eq.s32.totalorder %s17, 0
      %p44 = por %p42, %p43
      %p45 = scmp.ne.s32.totalorder %s37, %s39
      %p46 = scmp.eq.s32.totalorder %s22, 1
      %p47 = por %p45, %p46
      %p48 = scmp.ne.s32.totalorder %s39, %s40
      %p49 = scmp.eq.s32.totalorder %s22, 0
      %p50 = por %p48, %p49
      %p51 = scmp.ne.s32.totalorder %s39, %s40
      %p52 = scmp.eq.s32.totalorder %s23, 1
      %p53 = por %p51, %p52
      %p55 = scmp.ne.s32.totalorder %s40, %s54
      %p56 = scmp.eq.s32.totalorder %s23, 0
      %p57 = por %p55, %p56
      %s59 = sadd.s32 %s58, 1
      %p62 = scmp.eq.s32.totalorder %s17, 1
      %p63 = scmp.ne.s32.totalorder %s58, %s60
      %p64 = scmp.eq.s32.totalorder %s17, 0
      %p65 = por %p63, %p64
      %p66 = scmp.ne.s32.totalorder %s58, %s60
      %p67 = scmp.eq.s32.totalorder %s22, 1
      %p68 = por %p66, %p67
      %p69 = scmp.ne.s32.totalorder %s60, %s61
      %p70 = scmp.eq.s32.totalorder %s22, 0
      %p71 = por %p69, %p70
      %p72 = scmp.ne.s32.totalorder %s60, %s61
      %p73 = scmp.eq.s32.totalorder %s23, 1
      %p74 = por %p72, %p73
      %p76 = scmp.ne.s32.totalorder %s61, %s75
      %p77 = scmp.eq.s32.totalorder %s23, 0
      %p78 = por %p76, %p77
      %s79 = ssub.s32 %s24, %s36
      %s80 = ssub.s32 %s25, %s32
      %s81 = sor.u32 %s79, %s80
      %p82 = scmp.eq.s32.totalorder %s81, 0
      %s84 = sadd.s32 %s83, 1
      %s85 = scalar_select %p82, %s83, %s84
      %p88 = pneg %p82
      %p89 = scmp.eq.s32.totalorder %s17, 1
      %p90 = por %p88, %p89
      %p91 = scmp.ne.s32.totalorder %s83, %s86
      %p92 = scmp.eq.s32.totalorder %s17, 0
      %p93 = por %p91, %p92
      %p94 = scmp.ne.s32.totalorder %s83, %s86
      %p95 = scmp.eq.s32.totalorder %s22, 1
      %p96 = por %p94, %p95
      %p97 = scmp.ne.s32.totalorder %s86, %s87
      %p98 = scmp.eq.s32.totalorder %s22, 0
      %p99 = por %p97, %p98
      %p100 = scmp.ne.s32.totalorder %s86, %s87
      %p101 = scmp.eq.s32.totalorder %s23, 1
      %p102 = por %p100, %p101
      %p104 = scmp.ne.s32.totalorder %s87, %s103
      %p105 = scmp.eq.s32.totalorder %s23, 0
      %p106 = por %p104, %p105
      %s107 = ssub.s32 %s24, %s36
      %s108 = ssub.s32 %s25, %s32
      %s109 = sor.u32 %s107, %s108
      %p110 = scmp.eq.s32.totalorder %s109, 0
      %s112 = sadd.s32 %s111, 1
      %s113 = scalar_select %p110, %s111, %s112
      %p116 = pneg %p110
      %p117 = scmp.eq.s32.totalorder %s17, 1
      %p118 = por %p116, %p117
      %p119 = scmp.ne.s32.totalorder %s111, %s114
      %p120 = scmp.eq.s32.totalorder %s17, 0
      %p121 = por %p119, %p120
      %p122 = scmp.ne.s32.totalorder %s111, %s114
      %p123 = scmp.eq.s32.totalorder %s22, 1
      %p124 = por %p122, %p123
      %p125 = scmp.ne.s32.totalorder %s114, %s115
      %p126 = scmp.eq.s32.totalorder %s22, 0
      %p127 = por %p125, %p126
      %p128 = scmp.ne.s32.totalorder %s114, %s115
      %p129 = scmp.eq.s32.totalorder %s23, 1
      %p130 = por %p128, %p129
      %p132 = scmp.ne.s32.totalorder %s115, %s131
      %p133 = scmp.eq.s32.totalorder %s23, 0
      %p134 = por %p132, %p133
      %p135 = scmp.le.s32.totalorder 1, %s17
      %p136 = scmp.lt.s32.totalorder %s17, 3
      %p137 = pnand %p135, %p136
      %p138 = pneg %p137
      // Predicated region
      $region9: #{tpu_custom_call.1} parent=5 // pred_check
        _
      $region10: #{tpu_custom_call.1} parent=5 // pred_check_branch
        %140 = sbr.rel (%p137) target = $region12
      $region11: #{tpu_custom_call.1} parent=5 // pred_region
        %s141 = ssub.s32 %s17, 1
        // Predicated region
        $region13: #{tpu_custom_call.1} parent=11 // pred_check
          %p142 = pneg %p50
        $region14: #{tpu_custom_call.1} parent=11 // pred_check_branch
          %144 = sbr.rel (%p142) target = $region16
        $region15: #{tpu_custom_call.1} parent=11 // pred_region
          %s146 = ssub.s32 32, 32
          %147 = vsyncadd [#allocation5], %s146
          %150 = dma.hbm_to_smem %s0, 32, [#allocation2], [#allocation5]
        $region16: #{tpu_custom_call.1} parent=11 // pred_fallthru
          _
        // Predicated region
        $region17: #{tpu_custom_call.1} parent=11 // pred_check
          %p151 = pneg %p71
        $region18: #{tpu_custom_call.1} parent=11 // pred_check_branch
          %153 = sbr.rel (%p151) target = $region20
        $region19: #{tpu_custom_call.1} parent=11 // pred_region
          %s155 = ssub.s32 16, 16
          %156 = vsyncadd [#allocation6], %s155
          %s158 = sshll.u32 %s1, 4
          %s159 = int_to_ptr.vmem [resolvable:$true] %s158
          %161 = dma.vmem_to_smem %s159, 16, [#allocation7], [#allocation6]
        $region20: #{tpu_custom_call.1} parent=11 // pred_fallthru
          _
      $region12: #{tpu_custom_call.1} parent=5 // pred_fallthru
        _
      %p162 = scmp.lt.s32.totalorder %s17, 2
      // Predicated region
      $region21: #{tpu_custom_call.1} parent=5 // pred_check
        %p163 = pneg %p162
      $region22: #{tpu_custom_call.1} parent=5 // pred_check_branch
        %165 = sbr.rel (%p163) target = $region24
      $region23: #{tpu_custom_call.1} parent=5 // pred_region
        // Predicated region
        $region25: #{tpu_custom_call.1} parent=23 // pred_check
          %p166 = pneg %p93
        $region26: #{tpu_custom_call.1} parent=23 // pred_check_branch
          %168 = sbr.rel (%p166) target = $region28
        $region27: #{tpu_custom_call.1} parent=23 // pred_region
          %s169 = sand.u32 %s83, 1
          %s170 = scalar_lea.sflag [#allocation3], %s169
          %s171 = sand.u32 %s83, 1
          %s172 = smul.addr %s171, 4
          %s173 = scalar_lea.vmem [#allocation8], %s172
          %s174 = smul.u32 2, %s25
          %s176 = ssub.s32 64, 64
          %177 = vsyncadd %s170, %s176
          %s178 = smul.addr %s24, 2
          %s179 = sadd.s32 %s174, %s178
          %s180 = smul.addr %s179, 32
          %s181 = scalar_lea.hbm %s2, %s180
          %s183 = sshll.u32 %s173, 4
          %s184 = int_to_ptr.vmem [resolvable:$true] %s183
          %186 = dma.hbm_to_vmem [thread:$0]  %s181, 64, %s184, %s170
        $region28: #{tpu_custom_call.1} parent=23 // pred_fallthru
          _
      $region24: #{tpu_custom_call.1} parent=5 // pred_fallthru
        _
      %p187 = scmp.le.s32.totalorder 1, %s17
      %p188 = scmp.lt.s32.totalorder %s17, 3
      %p189 = pnand %p187, %p188
      %p190 = pneg %p189
      // Predicated region
      $region29: #{tpu_custom_call.1} parent=5 // pred_check
        _
      $region30: #{tpu_custom_call.1} parent=5 // pred_check_branch
        %192 = sbr.rel (%p189) target = $region32
      $region31: #{tpu_custom_call.1} parent=5 // pred_region
        %s193 = ssub.s32 %s17, 1
        // Predicated region
        $region33: #{tpu_custom_call.1} parent=31 // pred_check
          %p194 = pneg %p50
        $region34: #{tpu_custom_call.1} parent=31 // pred_check_branch
          %196 = sbr.rel (%p194) target = $region36
        $region35: #{tpu_custom_call.1} parent=31 // pred_region
          %197 = dma.done [#allocation5], 32
        $region36: #{tpu_custom_call.1} parent=31 // pred_fallthru
          _
        // Predicated region
        $region37: #{tpu_custom_call.1} parent=31 // pred_check
          %p198 = pneg %p71
        $region38: #{tpu_custom_call.1} parent=31 // pred_check_branch
          %200 = sbr.rel (%p198) target = $region40
        $region39: #{tpu_custom_call.1} parent=31 // pred_region
          %201 = dma.done [#allocation6], 16
        $region40: #{tpu_custom_call.1} parent=31 // pred_fallthru
          _
        %s202 = sand.u32 %s86, 1
        %s203 = scalar_lea.sflag [#allocation3], %s202
        %s204 = sand.u32 %s86, 1
        %s205 = smul.addr %s204, 4
        %s206 = scalar_lea.vmem [#allocation8], %s205
        // Predicated region
        $region41: #{tpu_custom_call.1} parent=31 // pred_check
          %p207 = pneg %p99
        $region42: #{tpu_custom_call.1} parent=31 // pred_check_branch
          %209 = sbr.rel (%p207) target = $region44
        $region43: #{tpu_custom_call.1} parent=31 // pred_region
          %210 = dma.done %s203, 64
        $region44: #{tpu_custom_call.1} parent=31 // pred_fallthru
          _
        %211 = sfence
        %p212 = pneg %p50
        %p213 = pneg %p47
        %p214 = pneg %p71
        %p215 = pneg %p68
        %s216 = sand.u32 %s86, 1
        %s217 = scalar_lea.sflag [#allocation3], %s216
        %s218 = sand.u32 %s86, 1
        %s219 = smul.addr %s218, 4
        %s220 = scalar_lea.vmem [#allocation8], %s219
        %p221 = pneg %p99
        %p222 = pneg %p96
        %p223 = pneg %p127
        %p224 = pneg %p124
        %s225 = sand.u32 %s114, 1
        %s226 = scalar_lea.sflag [#allocation4], %s225
        %s227 = sand.u32 %s114, 1
        %s228 = smul.addr %s227, 4
        %s229 = scalar_lea.vmem [#allocation9], %s228
        %s230 = smul.u32 2, %s27
        %s231 = smul.u32 2, %s27
        %v232 = vld [vmem:[%s206] ss:$2 sm:$0x3]
        %s233 = scalar_lea.vmem %s206, 1 [#allocation8]
        %v234 = vld [vmem:[%s233] ss:$2 sm:$0x3]
        %s235 = sld [smem:[#allocation2]]
        %v236 = vstv %s235
        %v237 = vmul.f32 %v232, %v236
        %s238 = sld [smem:[#allocation2 + $0x1]]
        %v239 = vstv %s238
        %v240 = vmul.f32 %v234, %v239
        %v241 = vadd.f32 %v237, %v240
        %s242 = sld [smem:[#allocation7]]
        %v243 = vstv %s242
        %v244 = vadd.f32 %v241, %v243
        %v245 = vlaneseq
        %vm246 = vcmp.ge.s32.totalorder %v245, 0
        %vm247 = vcmp.lt.s32.totalorder %v245, 256
        %vm248 = vmand %vm246, %vm247
        %249 = vst.msk [vmem:[%s229] ss:$2 sm:$0x3] %vm248, %v244
        %s250 = sld [smem:[#allocation2 + $0x80]]
        %v251 = vstv %s250
        %v252 = vmul.f32 %v232, %v251
        %s253 = sld [smem:[#allocation2 + $0x81]]
        %v254 = vstv %s253
        %v255 = vmul.f32 %v234, %v254
        %v256 = vadd.f32 %v252, %v255
        %s257 = sld [smem:[#allocation7 + $0x1]]
        %v258 = vstv %s257
        %v259 = vadd.f32 %v256, %v258
        %s260 = scalar_lea.vmem %s229, 1 [#allocation9]
        %261 = vst.msk [vmem:[%s260] ss:$2 sm:$0x3] %vm248, %v259
        %s262 = sand.u32 %s114, 1
        %s263 = scalar_lea.sflag [#allocation4], %s262
        %s264 = sand.u32 %s114, 1
        %s265 = smul.addr %s264, 4
        %s266 = scalar_lea.vmem [#allocation9], %s265
        // Predicated region
        $region45: #{tpu_custom_call.1} parent=31 // pred_check
          %p267 = pneg %p124
        $region46: #{tpu_custom_call.1} parent=31 // pred_check_branch
          %269 = sbr.rel (%p267) target = $region48
        $region47: #{tpu_custom_call.1} parent=31 // pred_region
          %s270 = smul.u32 2, %s27
          %s272 = ssub.s32 64, 64
          %273 = vsyncadd %s263, %s272
          %s274 = smul.addr %s26, 2
          %s275 = sadd.s32 %s270, %s274
          %s276 = smul.addr %s275, 32
          %s277 = scalar_lea.hbm %s3, %s276
          %s279 = sshll.u32 %s266, 4
          %s280 = int_to_ptr.vmem [resolvable:$true] %s279
          %282 = dma.vmem_to_hbm [thread:$0]  %s280, 64, %s277, %s263
        $region48: #{tpu_custom_call.1} parent=31 // pred_fallthru
          _
      $region32: #{tpu_custom_call.1} parent=5 // pred_fallthru
        _
      %p283 = scmp.le.s32.totalorder 2, %s17
      // Predicated region
      $region49: #{tpu_custom_call.1} parent=5 // pred_check
        %p284 = pneg %p283
      $region50: #{tpu_custom_call.1} parent=5 // pred_check_branch
        %286 = sbr.rel (%p284) target = $region52
      $region51: #{tpu_custom_call.1} parent=5 // pred_region
        %s287 = ssub.s32 %s17, 2
        // Predicated region
        $region53: #{tpu_custom_call.1} parent=51 // pred_check
          %p288 = pneg %p130
        $region54: #{tpu_custom_call.1} parent=51 // pred_check_branch
          %290 = sbr.rel (%p288) target = $region56
        $region55: #{tpu_custom_call.1} parent=51 // pred_region
          %s291 = sand.u32 %s115, 1
          %s292 = scalar_lea.sflag [#allocation4], %s291
          %s293 = sand.u32 %s115, 1
          %s294 = smul.addr %s293, 4
          %s295 = scalar_lea.vmem [#allocation9], %s294
          %296 = dma.done %s292, 64
        $region56: #{tpu_custom_call.1} parent=51 // pred_fallthru
          _
      $region52: #{tpu_custom_call.1} parent=5 // pred_fallthru
        _
    $region6: #{tpu_custom_call.1} parent=1 // loop_footer
      %s21 = sadd.s32 1, %s17
    $region7: #{tpu_custom_call.1} parent=1 // loop_footer_branch
      %16 = sbr.rel target = $region3
    $region8: #{tpu_custom_call.1} parent=1 // loop_exit
      _
    %297 = vsyncpa [#allocation3], 1
    %s298 = scalar_lea.sflag [#allocation3], 1
    %299 = vsyncpa %s298, 1
    %300 = vsyncpa [#allocation4], 1
    %s301 = scalar_lea.sflag [#allocation4], 1
    %302 = vsyncpa %s301, 1
    %303 = vsyncpa [#allocation5], 1
    %s304 = scalar_lea.sflag [#allocation5], 1
    %305 = vsyncpa %s304, 1
    %306 = vsyncpa [#allocation6], 1
    %s307 = scalar_lea.sflag [#allocation6], 1
    %308 = vsyncpa %s307, 1

</llo_original>
